<compile_context>
chip_gen: v5e
topology: v5e:2x2
jax: 0.10.0
libtpu: 0.0.40
codegen_flags: <defaults>
</compile_context>

<pallas_src>
import functools
import math

import jax
import jax.numpy as jnp
from jax import lax
from jax.experimental import pallas as pl
from jax.experimental.pallas import tpu as pltpu


def _round_up(x, m):
    return ((x + m - 1) // m) * m


def _cdiv(a, b):
    return -(-a // b)


@functools.lru_cache(maxsize=None)
def _vmem_budget_bytes():
    """Generation-aware scoped-VMEM budget (leaves headroom for compiler scratch)."""
    try:
        cap = int(pltpu.get_tpu_info().vmem_capacity_bytes)
    except Exception:
        return 48 * 1024 * 1024          # unknown gen: conservative, works everywhere
    if cap <= 64 * 1024 * 1024:          # v7x: 64 MiB physical per TensorCore
        return 40 * 1024 * 1024
    return 96 * 1024 * 1024              # v5e / v6e: 128 MiB physical


def _balanced_tm(m_rows, target):
    """Split M into near-equal tiles (multiple of 16) so the zero tail is small."""
    target = max(16, (target // 16) * 16)
    n_tiles = max(1, _cdiv(m_rows, target))
    return _round_up(_cdiv(m_rows, n_tiles), 16)


def _vmem_tm_cap(budget, k_dim, ncols):
    """Largest tm s.t. 2x bf16 patch + 1x bf16 weight + 2x bf16 out tiles fit VMEM."""
    fixed = k_dim * ncols * 2 + ncols * 4 + (2 << 20)   # weight + bias + slack
    per_row = 2 * k_dim * 2 + 2 * ncols * 2             # patches + output (dbl buffered)
    avail = budget - fixed
    if avail <= per_row * 16:
        return 16
    return max(16, (avail // per_row) // 16 * 16)


def _col_align(k_dim, n_cols):
    # 256-wide columns drive the full 256-wide MXU on v6e/v7x when compute-bound;
    # stay at 128 for small / memory-bound shapes to avoid extra store traffic.
    return 256 if (k_dim >= 512 and n_cols >= 256) else 128


# ----------------------------- Pallas kernels -------------------------------
def _shared_matmul_kernel(p_ref, w_ref, b_ref, o_ref):
    # p_ref: (TM, K) bf16, w_ref: (K, TN) bf16, b_ref: (1, TN) f32,
    # o_ref: (TM, TN) bf16 (lane-dense, TN multiple of 128)
    acc = jnp.dot(p_ref[...], w_ref[...], preferred_element_type=jnp.float32)
    acc = acc + b_ref[...]
    o_ref[...] = jnp.maximum(acc, 0.0).astype(o_ref.dtype)   # relu_ activation


def _replica_matmul_kernel(p_ref, w_ref, b_ref, o_ref):
    # p_ref: (1, TM, K) bf16, w_ref: (1, K, Cpad) bf16, b_ref: (1, 1, Cpad) f32,
    # o_ref: (1, TM, Cpad) bf16
    acc = jnp.dot(p_ref[0], w_ref[0], preferred_element_type=jnp.float32)
    acc = acc + b_ref[0]
    o_ref[0] = jnp.maximum(acc, 0.0).astype(o_ref.dtype)


def _shared_matmul(patches, w_cols, b_cols, tm, tn, single_buffer):
    """patches: [Mpad, K] bf16, w_cols: [K, Npad] bf16, b_cols: [1, Npad] f32."""
    m_pad, k_dim = patches.shape
    n_pad = w_cols.shape[-1]
    m_blocks = m_pad // tm
    n_blocks = n_pad // tn
    mode = pl.Buffered(1) if single_buffer else None
    cost = pl.CostEstimate(
        flops=2 * m_pad * k_dim * n_pad,
        transcendentals=0,
        bytes_accessed=(n_blocks * m_pad * k_dim * 2 + k_dim * n_pad * 2
                        + n_pad * 4 + m_pad * n_pad * 2))
    return pl.pallas_call(
        _shared_matmul_kernel,
        out_shape=jax.ShapeDtypeStruct((m_pad, n_pad), jnp.bfloat16),
        grid_spec=pltpu.PrefetchScalarGridSpec(
            num_scalar_prefetch=0,
            # inner loop over M tiles: the weight column-tile stays VMEM-resident.
            grid=(n_blocks, m_blocks),
            in_specs=[
                pl.BlockSpec((tm, k_dim), lambda nb, m: (m, 0)),
                pl.BlockSpec((k_dim, tn), lambda nb, m: (0, nb),
                             pipeline_mode=mode),
                pl.BlockSpec((1, tn), lambda nb, m: (0, nb),
                             pipeline_mode=mode),
            ],
            out_specs=pl.BlockSpec((tm, tn), lambda nb, m: (m, nb)),
        ),
        compiler_params=pltpu.CompilerParams(
            dimension_semantics=("parallel", "parallel"),
            vmem_limit_bytes=_vmem_budget_bytes()),
        cost_estimate=cost,
    )(patches, w_cols, b_cols)


def _replica_matmul(patches, w_mat, b_mat, tm, single_buffer):
    """patches: [n, Mpad, K] bf16, w_mat: [n, K, Cpad] bf16, b_mat: [n, 1, Cpad] f32."""
    n, m_pad, k_dim = patches.shape
    c_pad = w_mat.shape[-1]
    mode = pl.Buffered(1) if single_buffer else None
    cost = pl.CostEstimate(
        flops=2 * n * m_pad * k_dim * c_pad,
        transcendentals=0,
        bytes_accessed=n * (m_pad * k_dim * 2 + k_dim * c_pad * 2
                            + c_pad * 4 + m_pad * c_pad * 2))
    return pl.pallas_call(
        _replica_matmul_kernel,
        out_shape=jax.ShapeDtypeStruct((n, m_pad, c_pad), jnp.bfloat16),
        grid_spec=pltpu.PrefetchScalarGridSpec(
            num_scalar_prefetch=0,
            grid=(n, m_pad // tm),
            in_specs=[
                pl.BlockSpec((1, tm, k_dim), lambda r, m: (r, m, 0)),
                # per-replica weight/bias: resident across M tiles, single buffer
                pl.BlockSpec((1, k_dim, c_pad), lambda r, m: (r, 0, 0),
                             pipeline_mode=mode),
                pl.BlockSpec((1, 1, c_pad), lambda r, m: (r, 0, 0),
                             pipeline_mode=mode),
            ],
            out_specs=pl.BlockSpec((1, tm, c_pad), lambda r, m: (r, m, 0)),
        ),
        compiler_params=pltpu.CompilerParams(
            # "arbitrary" on the (often small, odd) replica axis so a v7x
            # megacore split lands on the larger, better-balanced M axis.
            dimension_semantics=("arbitrary", "parallel"),
            vmem_limit_bytes=_vmem_budget_bytes()),
        cost_estimate=cost,
    )(patches, w_mat, b_mat)


# ------------------------------ glue (JAX) ----------------------------------
def _extract_patches(x, kh, kw, sh, sw, ph, pw):
    """x: [B, C, H, W] -> patches [B*Ho*Wo, C*kh*kw] (feature order C, kh, kw)."""
    x = jnp.pad(x, ((0, 0), (0, 0), (ph, ph), (pw, pw)))
    B, C, H, W = x.shape
    Ho = (H - kh) // sh + 1
    Wo = (W - kw) // sw + 1
    cols = []
    for i in range(kh):
        for j in range(kw):
            cols.append(x[:, :, i:i + sh * Ho:sh, j:j + sw * Wo:sw])  # [B,C,Ho,Wo]
    patches = jnp.stack(cols, axis=2)                  # [B, C, kh*kw, Ho, Wo]
    patches = patches.reshape(B, C * kh * kw, Ho, Wo)  # [B, K, Ho, Wo]
    patches = jnp.transpose(patches, (0, 2, 3, 1))     # [B, Ho, Wo, K]
    return patches.reshape(B * Ho * Wo, C * kh * kw), Ho, Wo


def _parallel_conv2d_impl(img, weight, bias, *, strides=1, padding=0,
                          single_buffer=True):
    """Forward pass of ParallelConv2D.

    img:    [B, C, H, W] (shared) or [B, n, C, H, W] (per-replica)
    weight: [n, Cout, C, kh, kw]
    bias:   [n, Cout] or None
    returns [B, n, Cout, Ho, Wo]
    """
    n, Cout, C, kh, kw = weight.shape
    sh = sw = strides
    ph = pw = padding
    K = C * kh * kw
    out_dtype = img.dtype

    # bf16 operands everywhere (f32 accumulation in the MXU): halves the HBM
    # traffic of the dominant im2col patch stream and of the output writeback.
    img = img.astype(jnp.bfloat16)
    # [n, Cout, C, kh, kw] -> [n, K, Cout]  (K ordered C, kh, kw to match patches)
    w_mat = jnp.transpose(weight.reshape(n, Cout, K), (0, 2, 1)).astype(jnp.bfloat16)
    if bias is None:
        b_vec = jnp.zeros((n, Cout), jnp.float32)
    else:
        b_vec = bias.astype(jnp.float32)

    budget = _vmem_budget_bytes()

    if img.ndim == 4:
        # ------- shared-input path: fold replicas into the output columns -------
        assert img.shape[1] == C
        B = img.shape[0]
        p, Ho, Wo = _extract_patches(img, kh, kw, sh, sw, ph, pw)   # [M, K] bf16
        M = p.shape[0]
        NC = n * Cout
        align = _col_align(K, NC)
        if NC <= 1024:                       # single column tile (lane-dense)
            tn = _round_up(NC, align)
            n_pad = tn
        else:                                # tile columns: bounds VMEM for big n*Cout
            tn = 1024
            n_pad = _round_up(NC, tn)
        tm = _balanced_tm(M, min(512, _vmem_tm_cap(budget, K, tn)))
        m_pad = _round_up(M, tm)

        w_cols = jnp.transpose(w_mat, (1, 0, 2)).reshape(K, NC)     # [K, n*Cout]
        w_cols = jnp.pad(w_cols, ((0, 0), (0, n_pad - NC)))
        b_cols = jnp.pad(b_vec.reshape(1, NC), ((0, 0), (0, n_pad - NC)))
        p = jnp.pad(p, ((0, m_pad - M), (0, 0)))

        out = _shared_matmul(p, w_cols, b_cols, tm, tn, single_buffer)  # bf16
        out = out[:M, :NC].reshape(B, Ho, Wo, n, Cout)
        out = jnp.transpose(out, (0, 3, 4, 1, 2))                   # bf16 transpose
        return out.astype(out_dtype)                                # [B,n,Cout,Ho,Wo]

    elif img.ndim == 5:
        # ------- per-replica path -------
        assert img.shape[1] == n and img.shape[2] == C
        B = img.shape[0]
        x = jnp.transpose(img, (1, 0, 2, 3, 4)).reshape(n * B, C, *img.shape[3:])
        p, Ho, Wo = _extract_patches(x, kh, kw, sh, sw, ph, pw)     # [n*B*Ho*Wo, K]
        M = B * Ho * Wo
        p = p.reshape(n, M, K)
        align = _col_align(K, Cout)
        c_pad = _round_up(Cout, align)                              # lane-dense cols
        tm = _balanced_tm(M, min(512, _vmem_tm_cap(budget, K, c_pad)))
        m_pad = _round_up(M, tm)

        p = jnp.pad(p, ((0, 0), (0, m_pad - M), (0, 0)))
        w_pad = jnp.pad(w_mat, ((0, 0), (0, 0), (0, c_pad - Cout)))
        b_pad = jnp.pad(b_vec.reshape(n, 1, Cout), ((0, 0), (0, 0), (0, c_pad - Cout)))

        out = _replica_matmul(p, w_pad, b_pad, tm, single_buffer)   # [n,Mpad,Cpad] bf16
        out = out[:, :M, :Cout].reshape(n, B, Ho, Wo, Cout)
        out = jnp.transpose(out, (1, 0, 4, 2, 3))                   # bf16 transpose
        return out.astype(out_dtype)                                # [B,n,Cout,Ho,Wo]

    else:
        raise ValueError("Wrong img.ndim=%d" % img.ndim)


_jit_impl = jax.jit(_parallel_conv2d_impl,
                    static_argnames=("strides", "padding", "single_buffer"))

_SINGLE_BUFFER = True   # pl.Buffered(1) on grid-invariant weight/bias blocks


def parallel_conv2d(img, weight, bias, *, strides=1, padding=0):
    global _SINGLE_BUFFER
    try:
        return _jit_impl(img, weight, bias, strides=strides, padding=padding,
                         single_buffer=_SINGLE_BUFFER)
    except Exception:
        if not _SINGLE_BUFFER:
            raise
        # Graceful fallback if this JAX/Mosaic version rejects single-buffered
        # blocks; default double-buffering is always valid.
        _SINGLE_BUFFER = False
        return _jit_impl(img, weight, bias, strides=strides, padding=padding,
                         single_buffer=False)


# ------------------------- parameter construction ---------------------------
def make_params(in_channels, out_channels, kernel_size, n,
                kernel_init_gain=1.0, bias_init_value=0.0, seed=0):
    kh = kw = kernel_size
    key = jax.random.PRNGKey(seed)
    fan_in = in_channels * kh * kw
    # variance_scaling_init (fan_in, relu nonlinearity): std ~ gain*sqrt(2/fan_in)
    std = kernel_init_gain * math.sqrt(2.0 / fan_in)
    weight = std * jax.random.normal(
        key, (n, out_channels, in_channels, kh, kw), jnp.float32)
    bias = jnp.full((n, out_channels), bias_init_value, jnp.float32)
    return weight, bias


# ---------------------------------- main -------------------------------------
if __name__ == "__main__":
    B, C, H, W = 2, 4, 16, 16
    n, Cout, ksize = 3, 8, 3
    strides, padding = 1, 1

    key = jax.random.PRNGKey(0)
    k_img, _ = jax.random.split(key)
    img = jax.random.normal(k_img, (B, C, H, W), jnp.float32)

    weight, bias = make_params(C, Cout, ksize, n, seed=0)

    out = parallel_conv2d(img, weight, bias, strides=strides, padding=padding)
    out = jax.block_until_ready(out)

    # Reference: n independent convs with lax.conv_general_dilated (NCHW/OIHW).
    refs = []
    for r in range(n):
        y = lax.conv_general_dilated(
            img, weight[r], window_strides=(strides, strides),
            padding=((padding, padding), (padding, padding)),
            dimension_numbers=("NCHW", "OIHW", "NCHW"))
        y = y + bias[r][None, :, None, None]
        refs.append(jnp.maximum(y, 0.0))
    ref = jnp.stack(refs, axis=1)  # [B, n, Cout, Ho, Wo]

    assert out.shape == ref.shape == (B, n, Cout, H, W)
    # bf16 operands (f32 accumulate) -> loosen tolerance accordingly.
    assert jnp.allclose(out, ref, atol=5e-2, rtol=5e-2), \
        "max abs diff %f" % float(jnp.max(jnp.abs(out - ref)))

    # Also exercise the per-replica input path [B, n, C, H, W].
    img5 = jax.random.normal(jax.random.PRNGKey(1), (B, n, C, H, W), jnp.float32)
    out5 = jax.block_until_ready(
        parallel_conv2d(img5, weight, bias, strides=strides, padding=padding))
    refs5 = []
    for r in range(n):
        y = lax.conv_general_dilated(
            img5[:, r], weight[r], window_strides=(strides, strides),
            padding=((padding, padding), (padding, padding)),
            dimension_numbers=("NCHW", "OIHW", "NCHW"))
        y = y + bias[r][None, :, None, None]
        refs5.append(jnp.maximum(y, 0.0))
    ref5 = jnp.stack(refs5, axis=1)
    assert out5.shape == ref5.shape == (B, n, Cout, H, W)
    assert jnp.allclose(out5, ref5, atol=5e-2, rtol=5e-2), \
        "max abs diff %f" % float(jnp.max(jnp.abs(out5 - ref5)))

    print("KERNEL_OK")
</pallas_src>

<mosaic_0001>
module attributes {stable_mosaic.version = 11 : i64} {
  func.func @_shared_matmul_kernel(%arg0: i32, %arg1: i32, %arg2: memref<512x36xbf16, #tpu.memory_space<vmem>>, %arg3: memref<36x128xbf16, #tpu.memory_space<vmem>>, %arg4: memref<1x128xf32, #tpu.memory_space<vmem>>, %arg5: memref<512x128xbf16, #tpu.memory_space<vmem>>) attributes {dimension_semantics = [#tpu.dimension_semantics<parallel>, #tpu.dimension_semantics<parallel>], iteration_bounds = array<i64: 1, 1>, scalar_prefetch = 0 : i64, scratch_operands = 0 : i64, tpu.core_type = #tpu.core_type<tc>, window_params = [{transform_indices = @transform_0, window_bounds = array<i64: 512, 36>}, {pipeline_mode = #tpu.pipeline_mode<synchronous>, transform_indices = @transform_1, window_bounds = array<i64: 36, 128>}, {pipeline_mode = #tpu.pipeline_mode<synchronous>, transform_indices = @transform_2, window_bounds = array<i64: 1, 128>}, {transform_indices = @transform_3, window_bounds = array<i64: 512, 128>}]} {
    %c0 = arith.constant 0 : index
    %c0_0 = arith.constant 0 : index
    %0 = vector.load %arg2[%c0, %c0_0] : memref<512x36xbf16, #tpu.memory_space<vmem>>, vector<512x36xbf16>
    %c0_1 = arith.constant 0 : index
    %c0_2 = arith.constant 0 : index
    %1 = vector.load %arg3[%c0_1, %c0_2] : memref<36x128xbf16, #tpu.memory_space<vmem>>, vector<36x128xbf16>
    %cst = arith.constant dense<0.000000e+00> : vector<512x128xf32>
    %2 = tpu.matmul %0, %1, %cst {dimension_numbers = #tpu.dot_dimension_numbers<[1], [0], [0], [1], [0, 0, 1, 1], [], []>} : vector<512x36xbf16>, vector<36x128xbf16>, vector<512x128xf32> -> vector<512x128xf32>
    %c0_3 = arith.constant 0 : index
    %c0_4 = arith.constant 0 : index
    %3 = vector.load %arg4[%c0_3, %c0_4] : memref<1x128xf32, #tpu.memory_space<vmem>>, vector<1x128xf32>
    %4 = vector.broadcast %3 : vector<1x128xf32> to vector<512x128xf32>
    %5 = arith.addf %2, %4 : vector<512x128xf32>
    %cst_5 = arith.constant 0.000000e+00 : f32
    %6 = vector.broadcast %cst_5 : f32 to vector<512x128xf32>
    %7 = arith.maximumf %5, %6 : vector<512x128xf32>
    %8 = arith.truncf %7 : vector<512x128xf32> to vector<512x128xbf16>
    %c0_6 = arith.constant 0 : index
    %c0_7 = arith.constant 0 : index
    %9 = vector.load %arg5[%c0_6, %c0_7] : memref<512x128xbf16, #tpu.memory_space<vmem>>, vector<512x128xbf16>
    tpu.vector_store %arg5[%c0_6, %c0_7], %8 {strides = array<i32>} : memref<512x128xbf16, #tpu.memory_space<vmem>>, vector<512x128xbf16>,
    return
  }
  func.func @transform_0(%arg0: i32, %arg1: i32) -> (i32, i32) {
    %c0_i32 = arith.constant 0 : i32
    %c0_i32_0 = arith.constant 0 : i32
    return %arg1, %c0_i32 : i32, i32
  }
  func.func @transform_1(%arg0: i32, %arg1: i32) -> (i32, i32) {
    %c0_i32 = arith.constant 0 : i32
    %c0_i32_0 = arith.constant 0 : i32
    return %c0_i32, %arg0 : i32, i32
  }
  func.func @transform_2(%arg0: i32, %arg1: i32) -> (i32, i32) {
    %c0_i32 = arith.constant 0 : i32
    %c0_i32_0 = arith.constant 0 : i32
    return %c0_i32, %arg0 : i32, i32
  }
  func.func @transform_3(%arg0: i32, %arg1: i32) -> (i32, i32) {
    %c0_i32 = arith.constant 0 : i32
    return %arg1, %arg0 : i32, i32
  }
}

module attributes {stable_mosaic.version = 11 : i64} {
  func.func @_shared_matmul_kernel(%arg0: i32, %arg1: i32, %arg2: memref<512x36xbf16, #tpu.memory_space<vmem>>, %arg3: memref<36x128xbf16, #tpu.memory_space<vmem>>, %arg4: memref<1x128xf32, #tpu.memory_space<vmem>>, %arg5: memref<512x128xbf16, #tpu.memory_space<vmem>>) attributes {dimension_semantics = [#tpu.dimension_semantics<parallel>, #tpu.dimension_semantics<parallel>], iteration_bounds = array<i64: 1, 1>, scalar_prefetch = 0 : i64, scratch_operands = 0 : i64, tpu.core_type = #tpu.core_type<tc>, window_params = [{transform_indices = @transform_0, window_bounds = array<i64: 512, 36>}, {transform_indices = @transform_1, window_bounds = array<i64: 36, 128>}, {transform_indices = @transform_2, window_bounds = array<i64: 1, 128>}, {transform_indices = @transform_3, window_bounds = array<i64: 512, 128>}]} {
    %c0 = arith.constant 0 : index
    %c0_0 = arith.constant 0 : index
    %0 = vector.load %arg2[%c0, %c0_0] : memref<512x36xbf16, #tpu.memory_space<vmem>>, vector<512x36xbf16>
    %c0_1 = arith.constant 0 : index
    %c0_2 = arith.constant 0 : index
    %1 = vector.load %arg3[%c0_1, %c0_2] : memref<36x128xbf16, #tpu.memory_space<vmem>>, vector<36x128xbf16>
    %cst = arith.constant dense<0.000000e+00> : vector<512x128xf32>
    %2 = tpu.matmul %0, %1, %cst {dimension_numbers = #tpu.dot_dimension_numbers<[1], [0], [0], [1], [0, 0, 1, 1], [], []>} : vector<512x36xbf16>, vector<36x128xbf16>, vector<512x128xf32> -> vector<512x128xf32>
    %c0_3 = arith.constant 0 : index
    %c0_4 = arith.constant 0 : index
    %3 = vector.load %arg4[%c0_3, %c0_4] : memref<1x128xf32, #tpu.memory_space<vmem>>, vector<1x128xf32>
    %4 = vector.broadcast %3 : vector<1x128xf32> to vector<512x128xf32>
    %5 = arith.addf %2, %4 : vector<512x128xf32>
    %cst_5 = arith.constant 0.000000e+00 : f32
    %6 = vector.broadcast %cst_5 : f32 to vector<512x128xf32>
    %7 = arith.maximumf %5, %6 : vector<512x128xf32>
    %8 = arith.truncf %7 : vector<512x128xf32> to vector<512x128xbf16>
    %c0_6 = arith.constant 0 : index
    %c0_7 = arith.constant 0 : index
    %9 = vector.load %arg5[%c0_6, %c0_7] : memref<512x128xbf16, #tpu.memory_space<vmem>>, vector<512x128xbf16>
    tpu.vector_store %arg5[%c0_6, %c0_7], %8 {strides = array<i32>} : memref<512x128xbf16, #tpu.memory_space<vmem>>, vector<512x128xbf16>,
    return
  }
  func.func @transform_0(%arg0: i32, %arg1: i32) -> (i32, i32) {
    %c0_i32 = arith.constant 0 : i32
    %c0_i32_0 = arith.constant 0 : i32
    return %arg1, %c0_i32 : i32, i32
  }
  func.func @transform_1(%arg0: i32, %arg1: i32) -> (i32, i32) {
    %c0_i32 = arith.constant 0 : i32
    %c0_i32_0 = arith.constant 0 : i32
    return %c0_i32, %arg0 : i32, i32
  }
  func.func @transform_2(%arg0: i32, %arg1: i32) -> (i32, i32) {
    %c0_i32 = arith.constant 0 : i32
    %c0_i32_0 = arith.constant 0 : i32
    return %c0_i32, %arg0 : i32, i32
  }
  func.func @transform_3(%arg0: i32, %arg1: i32) -> (i32, i32) {
    %c0_i32 = arith.constant 0 : i32
    return %arg1, %arg0 : i32, i32
  }
}

</mosaic_0001>

<llo_original>
// kernel: _parallel_conv2d_impl.1
$region0: #{_parallel_conv2d_impl.1}
  #allocation0 [shape = 'u32[]', space=smem, size = 0x4, offset = 0x4, fixed_abs, tag = 'smem constant byte address 0x4 - core index']
  #allocation1 [shape = 'u32[72,128]{1,0:T(1,128)}', space=vmem, size = 0x9000, scoped, tag = 'internal scratch']
  %s0 = inlined_call_operand.vmem [shape: bf16[512,36], index: 0, kind: input, shape index: {}]
  %s1 = inlined_call_operand.vmem [shape: bf16[36,128], index: 1, kind: input, shape index: {}]
  %s2 = inlined_call_operand.vmem [shape: f32[1,128], index: 2, kind: input, shape index: {}]
  %s3 = inlined_call_operand.vmem [shape: bf16[512,128], index: 3, kind: output, shape index: {}]
  %s4 = sld [smem:[#allocation0]]
  $region22: #{_parallel_conv2d_impl.1} parent=0
    _
  %s6 = ssub.s32 1, %s4
  %s7 = scalar_select 0, %s6, %s4
  // Predicated region
  $region2: #{_parallel_conv2d_impl.1} parent=0 // pred_check
    _
  $region3: #{_parallel_conv2d_impl.1} parent=0 // pred_check_branch
    %9 = sbr.rel (0) target = $region5
  $region4: #{_parallel_conv2d_impl.1} parent=0 // pred_region
    _
  $region5: #{_parallel_conv2d_impl.1} parent=0 // pred_fallthru
    _
  // Predicated region
  $region6: #{_parallel_conv2d_impl.1} parent=0 // pred_check
    _
  $region7: #{_parallel_conv2d_impl.1} parent=0 // pred_check_branch
    %11 = sbr.rel (0) target = $region9
  $region8: #{_parallel_conv2d_impl.1} parent=0 // pred_region
    _
  $region9: #{_parallel_conv2d_impl.1} parent=0 // pred_fallthru
    _
  // Predicated region
  $region10: #{_parallel_conv2d_impl.1} parent=0 // pred_check
    _
  $region11: #{_parallel_conv2d_impl.1} parent=0 // pred_check_branch
    %13 = sbr.rel (0) target = $region13
  $region12: #{_parallel_conv2d_impl.1} parent=0 // pred_region
    _
  $region13: #{_parallel_conv2d_impl.1} parent=0 // pred_fallthru
    _
  %v15 = vld [vmem:[%s0] sm:$0xf]
  %v16 = vld [vmem:[%s0 + $0x4] sm:$0xf]
  %v17 = vld [vmem:[%s0 + $0x8] sm:$0xf]
  %v18 = vld [vmem:[%s0 + $0xc] sm:$0xf]
  %v19 = vld [vmem:[%s0 + $0x10] sm:$0xf]
  %v20 = vld [vmem:[%s0 + $0x14] sm:$0xf]
  %v21 = vld [vmem:[%s0 + $0x18] sm:$0xf]
  %v22 = vld [vmem:[%s0 + $0x1c] sm:$0xf]
  %v23 = vld [vmem:[%s0 + $0x20] sm:$0xf]
  %v24 = vld [vmem:[%s0 + $0x24] sm:$0xf]
  %v25 = vld [vmem:[%s0 + $0x28] sm:$0xf]
  %v26 = vld [vmem:[%s0 + $0x2c] sm:$0xf]
  %v27 = vld [vmem:[%s0 + $0x30] sm:$0xf]
  %v28 = vld [vmem:[%s0 + $0x34] sm:$0xf]
  %v29 = vld [vmem:[%s0 + $0x38] sm:$0xf]
  %v30 = vld [vmem:[%s0 + $0x3c] sm:$0xf]
  %v31 = vld [vmem:[%s0 + $0x40] sm:$0xf]
  %v32 = vld [vmem:[%s0 + $0x44] sm:$0xf]
  %v33 = vld [vmem:[%s0 + $0x48] sm:$0xf]
  %v34 = vld [vmem:[%s0 + $0x4c] sm:$0xf]
  %v35 = vld [vmem:[%s0 + $0x50] sm:$0xf]
  %v36 = vld [vmem:[%s0 + $0x54] sm:$0xf]
  %v37 = vld [vmem:[%s0 + $0x58] sm:$0xf]
  %v38 = vld [vmem:[%s0 + $0x5c] sm:$0xf]
  %v39 = vld [vmem:[%s0 + $0x60] sm:$0xf]
  %v40 = vld [vmem:[%s0 + $0x64] sm:$0xf]
  %v41 = vld [vmem:[%s0 + $0x68] sm:$0xf]
  %v42 = vld [vmem:[%s0 + $0x6c] sm:$0xf]
  %v43 = vld [vmem:[%s0 + $0x70] sm:$0xf]
  %v44 = vld [vmem:[%s0 + $0x74] sm:$0xf]
  %v45 = vld [vmem:[%s0 + $0x78] sm:$0xf]
  %v46 = vld [vmem:[%s0 + $0x7c] sm:$0xf]
  %v47 = vld [vmem:[%s0 + $0x80] sm:$0xf]
  %v48 = vld [vmem:[%s0 + $0x84] sm:$0xf]
  %v49 = vld [vmem:[%s0 + $0x88] sm:$0xf]
  %v50 = vld [vmem:[%s0 + $0x8c] sm:$0xf]
  %v51 = vld [vmem:[%s0 + $0x90] sm:$0xf]
  %v52 = vld [vmem:[%s0 + $0x94] sm:$0xf]
  %v53 = vld [vmem:[%s0 + $0x98] sm:$0xf]
  %v54 = vld [vmem:[%s0 + $0x9c] sm:$0xf]
  %v55 = vld [vmem:[%s0 + $0xa0] sm:$0xf]
  %v56 = vld [vmem:[%s0 + $0xa4] sm:$0xf]
  %v57 = vld [vmem:[%s0 + $0xa8] sm:$0xf]
  %v58 = vld [vmem:[%s0 + $0xac] sm:$0xf]
  %v59 = vld [vmem:[%s0 + $0xb0] sm:$0xf]
  %v60 = vld [vmem:[%s0 + $0xb4] sm:$0xf]
  %v61 = vld [vmem:[%s0 + $0xb8] sm:$0xf]
  %v62 = vld [vmem:[%s0 + $0xbc] sm:$0xf]
  %v63 = vld [vmem:[%s0 + $0xc0] sm:$0xf]
  %v64 = vld [vmem:[%s0 + $0xc4] sm:$0xf]
  %v65 = vld [vmem:[%s0 + $0xc8] sm:$0xf]
  %v66 = vld [vmem:[%s0 + $0xcc] sm:$0xf]
  %v67 = vld [vmem:[%s0 + $0xd0] sm:$0xf]
  %v68 = vld [vmem:[%s0 + $0xd4] sm:$0xf]
  %v69 = vld [vmem:[%s0 + $0xd8] sm:$0xf]
  %v70 = vld [vmem:[%s0 + $0xdc] sm:$0xf]
  %v71 = vld [vmem:[%s0 + $0xe0] sm:$0xf]
  %v72 = vld [vmem:[%s0 + $0xe4] sm:$0xf]
  %v73 = vld [vmem:[%s0 + $0xe8] sm:$0xf]
  %v74 = vld [vmem:[%s0 + $0xec] sm:$0xf]
  %v75 = vld [vmem:[%s0 + $0xf0] sm:$0xf]
  %v76 = vld [vmem:[%s0 + $0xf4] sm:$0xf]
  %v77 = vld [vmem:[%s0 + $0xf8] sm:$0xf]
  %v78 = vld [vmem:[%s0 + $0xfc] sm:$0xf]
  %v79 = vld [vmem:[%s1] sm:$0xf]
  %v80 = vld [vmem:[%s1 + $0x4] sm:$0xf]
  %v81 = vld [vmem:[%s1 + $0x8] sm:$0xf]
  %v82 = vld [vmem:[%s1 + $0xc] sm:$0xf]
  %v83 = vld [vmem:[%s1 + $0x10] sm:$0x3]
  %v84 = vld [vmem:[%s2] sm:$0x1]
  %v86 = vperm.slane %v84, 0
  %v152 = vunpack.c.l.b16 %v15
  %v153 = vunpack.c.l.b16 %v16
  %v154 = vunpack.c.l.b16 %v17
  %v155 = vunpack.c.l.b16 %v18
  %v156 = vunpack.c.l.b16 %v19
  %v157 = vunpack.c.l.b16 %v20
  %v158 = vunpack.c.l.b16 %v21
  %v159 = vunpack.c.l.b16 %v22
  %v160 = vunpack.c.l.b16 %v23
  %v161 = vunpack.c.l.b16 %v24
  %v162 = vunpack.c.l.b16 %v25
  %v163 = vunpack.c.l.b16 %v26
  %v164 = vunpack.c.l.b16 %v27
  %v165 = vunpack.c.l.b16 %v28
  %v166 = vunpack.c.l.b16 %v29
  %v167 = vunpack.c.l.b16 %v30
  %v168 = vunpack.c.l.b16 %v31
  %v169 = vunpack.c.l.b16 %v32
  %v170 = vunpack.c.l.b16 %v33
  %v171 = vunpack.c.l.b16 %v34
  %v172 = vunpack.c.l.b16 %v35
  %v173 = vunpack.c.l.b16 %v36
  %v174 = vunpack.c.l.b16 %v37
  %v175 = vunpack.c.l.b16 %v38
  %v176 = vunpack.c.l.b16 %v39
  %v177 = vunpack.c.l.b16 %v40
  %v178 = vunpack.c.l.b16 %v41
  %v179 = vunpack.c.l.b16 %v42
  %v180 = vunpack.c.l.b16 %v43
  %v181 = vunpack.c.l.b16 %v44
  %v182 = vunpack.c.l.b16 %v45
  %v183 = vunpack.c.l.b16 %v46
  %v184 = vunpack.c.l.b16 %v47
  %v185 = vunpack.c.l.b16 %v48
  %v186 = vunpack.c.l.b16 %v49
  %v187 = vunpack.c.l.b16 %v50
  %v188 = vunpack.c.l.b16 %v51
  %v189 = vunpack.c.l.b16 %v52
  %v190 = vunpack.c.l.b16 %v53
  %v191 = vunpack.c.l.b16 %v54
  %v192 = vunpack.c.l.b16 %v55
  %v193 = vunpack.c.l.b16 %v56
  %v194 = vunpack.c.l.b16 %v57
  %v195 = vunpack.c.l.b16 %v58
  %v196 = vunpack.c.l.b16 %v59
  %v197 = vunpack.c.l.b16 %v60
  %v198 = vunpack.c.l.b16 %v61
  %v199 = vunpack.c.l.b16 %v62
  %v200 = vunpack.c.l.b16 %v63
  %v201 = vunpack.c.l.b16 %v64
  %v202 = vunpack.c.l.b16 %v65
  %v203 = vunpack.c.l.b16 %v66
  %v204 = vunpack.c.l.b16 %v67
  %v205 = vunpack.c.l.b16 %v68
  %v206 = vunpack.c.l.b16 %v69
  %v207 = vunpack.c.l.b16 %v70
  %v208 = vunpack.c.l.b16 %v71
  %v209 = vunpack.c.l.b16 %v72
  %v210 = vunpack.c.l.b16 %v73
  %v211 = vunpack.c.l.b16 %v74
  %v212 = vunpack.c.l.b16 %v75
  %v213 = vunpack.c.l.b16 %v76
  %v214 = vunpack.c.l.b16 %v77
  %v215 = vunpack.c.l.b16 %v78
  %v216 = vpack.c.b16 %v153, %v152
  %v217 = vpack.c.b16 %v155, %v154
  %v218 = vpack.c.b16 %v157, %v156
  %v219 = vpack.c.b16 %v159, %v158
  %v220 = vpack.c.b16 %v161, %v160
  %v221 = vpack.c.b16 %v163, %v162
  %v222 = vpack.c.b16 %v165, %v164
  %v223 = vpack.c.b16 %v167, %v166
  %v224 = vpack.c.b16 %v169, %v168
  %v225 = vpack.c.b16 %v171, %v170
  %v226 = vpack.c.b16 %v173, %v172
  %v227 = vpack.c.b16 %v175, %v174
  %v228 = vpack.c.b16 %v177, %v176
  %v229 = vpack.c.b16 %v179, %v178
  %v230 = vpack.c.b16 %v181, %v180
  %v231 = vpack.c.b16 %v183, %v182
  %v232 = vpack.c.b16 %v185, %v184
  %v233 = vpack.c.b16 %v187, %v186
  %v234 = vpack.c.b16 %v189, %v188
  %v235 = vpack.c.b16 %v191, %v190
  %v236 = vpack.c.b16 %v193, %v192
  %v237 = vpack.c.b16 %v195, %v194
  %v238 = vpack.c.b16 %v197, %v196
  %v239 = vpack.c.b16 %v199, %v198
  %v240 = vpack.c.b16 %v201, %v200
  %v241 = vpack.c.b16 %v203, %v202
  %v242 = vpack.c.b16 %v205, %v204
  %v243 = vpack.c.b16 %v207, %v206
  %v244 = vpack.c.b16 %v209, %v208
  %v245 = vpack.c.b16 %v211, %v210
  %v246 = vpack.c.b16 %v213, %v212
  %v247 = vpack.c.b16 %v215, %v214
  %v253 = vunpack.c.l.b16 %v79
  %v254 = vunpack.c.l.b16 %v80
  %v255 = vunpack.c.l.b16 %v81
  %v256 = vunpack.c.l.b16 %v82
  %v257 = vunpack.c.l.b16 %v83
  %v258 = vpack.c.b16 %v254, %v253
  %v259 = vpack.c.b16 %v256, %v255
  %v260 = vpack.c.b16 %v257, %v257
  %vm263 = vcmask 293888
  %v265 = vsel %vm263, %v216, 0
  %v268 = vsel %vm263, %v217, 0
  %v271 = vsel %vm263, %v218, 0
  %v274 = vsel %vm263, %v219, 0
  %v277 = vsel %vm263, %v220, 0
  %v280 = vsel %vm263, %v221, 0
  %v283 = vsel %vm263, %v222, 0
  %v286 = vsel %vm263, %v223, 0
  %v289 = vsel %vm263, %v224, 0
  %v292 = vsel %vm263, %v225, 0
  %v295 = vsel %vm263, %v226, 0
  %v298 = vsel %vm263, %v227, 0
  %v301 = vsel %vm263, %v228, 0
  %v304 = vsel %vm263, %v229, 0
  %v307 = vsel %vm263, %v230, 0
  %v310 = vsel %vm263, %v231, 0
  %v313 = vsel %vm263, %v232, 0
  %v316 = vsel %vm263, %v233, 0
  %v319 = vsel %vm263, %v234, 0
  %v322 = vsel %vm263, %v235, 0
  %v325 = vsel %vm263, %v236, 0
  %v328 = vsel %vm263, %v237, 0
  %v331 = vsel %vm263, %v238, 0
  %v334 = vsel %vm263, %v239, 0
  %v337 = vsel %vm263, %v240, 0
  %v340 = vsel %vm263, %v241, 0
  %v343 = vsel %vm263, %v242, 0
  %v346 = vsel %vm263, %v243, 0
  %v349 = vsel %vm263, %v244, 0
  %v352 = vsel %vm263, %v245, 0
  %v355 = vsel %vm263, %v246, 0
  %v358 = vsel %vm263, %v247, 0
  %vm360 = vcmask 1041408
  %v362 = vsel %vm360, %v260, 0
  %364 = vmatpush.bf16.msra.mxu0 0
  %365 = vmatpush.bf16.msra.mxu0 0
  %366 = vmatpush.bf16.msra.mxu0 0
  %367 = vmatpush.bf16.msra.mxu0 0
  %368 = vmatpush.bf16.msra.mxu0 0
  %369 = vmatpush.bf16.msra.mxu0 %v362
  %370 = vmatpush.bf16.msra.mxu0 %v259
  %371 = vmatpush.bf16.msra.mxu0 %v258
  %372 = vmatmul.bf16.gmra.mxu0 %v265
  %v373 = vpop.f32.mrf.mxu0
  %v374 = vadd.f32 %v86, %v373
  %v375 = vpop.f32.mrf.mxu0
  %v376 = vadd.f32 %v86, %v375
  %377 = vmatmul.bf16.gmra.mxu0 %v268
  %v378 = vpop.f32.mrf.mxu0
  %v379 = vadd.f32 %v86, %v378
  %v380 = vpop.f32.mrf.mxu0
  %v381 = vadd.f32 %v86, %v380
  %382 = vmatmul.bf16.gmra.mxu0 %v271
  %v383 = vpop.f32.mrf.mxu0
  %v384 = vadd.f32 %v86, %v383
  %v385 = vpop.f32.mrf.mxu0
  %v386 = vadd.f32 %v86, %v385
  %387 = vmatmul.bf16.gmra.mxu0 %v274
  %v388 = vpop.f32.mrf.mxu0
  %v389 = vadd.f32 %v86, %v388
  %v390 = vpop.f32.mrf.mxu0
  %v391 = vadd.f32 %v86, %v390
  %392 = vmatmul.bf16.gmra.mxu0 %v277
  %v393 = vpop.f32.mrf.mxu0
  %v394 = vadd.f32 %v86, %v393
  %v395 = vpop.f32.mrf.mxu0
  %v396 = vadd.f32 %v86, %v395
  %397 = vmatmul.bf16.gmra.mxu0 %v280
  %v398 = vpop.f32.mrf.mxu0
  %v399 = vadd.f32 %v86, %v398
  %v400 = vpop.f32.mrf.mxu0
  %v401 = vadd.f32 %v86, %v400
  %402 = vmatmul.bf16.gmra.mxu0 %v283
  %v403 = vpop.f32.mrf.mxu0
  %v404 = vadd.f32 %v86, %v403
  %v405 = vpop.f32.mrf.mxu0
  %v406 = vadd.f32 %v86, %v405
  %407 = vmatmul.bf16.gmra.mxu0 %v286
  %v408 = vpop.f32.mrf.mxu0
  %v409 = vadd.f32 %v86, %v408
  %v410 = vpop.f32.mrf.mxu0
  %v411 = vadd.f32 %v86, %v410
  %412 = vmatmul.bf16.gmra.mxu0 %v289
  %v413 = vpop.f32.mrf.mxu0
  %v414 = vadd.f32 %v86, %v413
  %v415 = vpop.f32.mrf.mxu0
  %v416 = vadd.f32 %v86, %v415
  %417 = vmatmul.bf16.gmra.mxu0 %v292
  %v418 = vpop.f32.mrf.mxu0
  %v419 = vadd.f32 %v86, %v418
  %v420 = vpop.f32.mrf.mxu0
  %v421 = vadd.f32 %v86, %v420
  %422 = vmatmul.bf16.gmra.mxu0 %v295
  %v423 = vpop.f32.mrf.mxu0
  %v424 = vadd.f32 %v86, %v423
  %v425 = vpop.f32.mrf.mxu0
  %v426 = vadd.f32 %v86, %v425
  %427 = vmatmul.bf16.gmra.mxu0 %v298
  %v428 = vpop.f32.mrf.mxu0
  %v429 = vadd.f32 %v86, %v428
  %v430 = vpop.f32.mrf.mxu0
  %v431 = vadd.f32 %v86, %v430
  %432 = vmatmul.bf16.gmra.mxu0 %v301
  %v433 = vpop.f32.mrf.mxu0
  %v434 = vadd.f32 %v86, %v433
  %v435 = vpop.f32.mrf.mxu0
  %v436 = vadd.f32 %v86, %v435
  %437 = vmatmul.bf16.gmra.mxu0 %v304
  %v438 = vpop.f32.mrf.mxu0
  %v439 = vadd.f32 %v86, %v438
  %v440 = vpop.f32.mrf.mxu0
  %v441 = vadd.f32 %v86, %v440
  %442 = vmatmul.bf16.gmra.mxu0 %v307
  %v443 = vpop.f32.mrf.mxu0
  %v444 = vadd.f32 %v86, %v443
  %v445 = vpop.f32.mrf.mxu0
  %v446 = vadd.f32 %v86, %v445
  %447 = vmatmul.bf16.gmra.mxu0 %v310
  %v448 = vpop.f32.mrf.mxu0
  %v449 = vadd.f32 %v86, %v448
  %v450 = vpop.f32.mrf.mxu0
  %v451 = vadd.f32 %v86, %v450
  %452 = vmatmul.bf16.gmra.mxu0 %v313
  %v453 = vpop.f32.mrf.mxu0
  %v454 = vadd.f32 %v86, %v453
  %v455 = vpop.f32.mrf.mxu0
  %v456 = vadd.f32 %v86, %v455
  %457 = vmatmul.bf16.gmra.mxu0 %v316
  %v458 = vpop.f32.mrf.mxu0
  %v459 = vadd.f32 %v86, %v458
  %v460 = vpop.f32.mrf.mxu0
  %v461 = vadd.f32 %v86, %v460
  %462 = vmatmul.bf16.gmra.mxu0 %v319
  %v463 = vpop.f32.mrf.mxu0
  %v464 = vadd.f32 %v86, %v463
  %v465 = vpop.f32.mrf.mxu0
  %v466 = vadd.f32 %v86, %v465
  %467 = vmatmul.bf16.gmra.mxu0 %v322
  %v468 = vpop.f32.mrf.mxu0
  %v469 = vadd.f32 %v86, %v468
  %v470 = vpop.f32.mrf.mxu0
  %v471 = vadd.f32 %v86, %v470
  %472 = vmatmul.bf16.gmra.mxu0 %v325
  %v473 = vpop.f32.mrf.mxu0
  %v474 = vadd.f32 %v86, %v473
  %v475 = vpop.f32.mrf.mxu0
  %v476 = vadd.f32 %v86, %v475
  %477 = vmatmul.bf16.gmra.mxu0 %v328
  %v478 = vpop.f32.mrf.mxu0
  %v479 = vadd.f32 %v86, %v478
  %v480 = vpop.f32.mrf.mxu0
  %v481 = vadd.f32 %v86, %v480
  %482 = vmatmul.bf16.gmra.mxu0 %v331
  %v483 = vpop.f32.mrf.mxu0
  %v484 = vadd.f32 %v86, %v483
  %v485 = vpop.f32.mrf.mxu0
  %v486 = vadd.f32 %v86, %v485
  %487 = vmatmul.bf16.gmra.mxu0 %v334
  %v488 = vpop.f32.mrf.mxu0
  %v489 = vadd.f32 %v86, %v488
  %v490 = vpop.f32.mrf.mxu0
  %v491 = vadd.f32 %v86, %v490
  %492 = vmatmul.bf16.gmra.mxu0 %v337
  %v493 = vpop.f32.mrf.mxu0
  %v494 = vadd.f32 %v86, %v493
  %v495 = vpop.f32.mrf.mxu0
  %v496 = vadd.f32 %v86, %v495
  %497 = vmatmul.bf16.gmra.mxu0 %v340
  %v498 = vpop.f32.mrf.mxu0
  %v499 = vadd.f32 %v86, %v498
  %v500 = vpop.f32.mrf.mxu0
  %v501 = vadd.f32 %v86, %v500
  %502 = vmatmul.bf16.gmra.mxu0 %v343
  %v503 = vpop.f32.mrf.mxu0
  %v504 = vadd.f32 %v86, %v503
  %v505 = vpop.f32.mrf.mxu0
  %v506 = vadd.f32 %v86, %v505
  %507 = vmatmul.bf16.gmra.mxu0 %v346
  %v508 = vpop.f32.mrf.mxu0
  %v509 = vadd.f32 %v86, %v508
  %v510 = vpop.f32.mrf.mxu0
  %v511 = vadd.f32 %v86, %v510
  %512 = vmatmul.bf16.gmra.mxu0 %v349
  %v513 = vpop.f32.mrf.mxu0
  %v514 = vadd.f32 %v86, %v513
  %v515 = vpop.f32.mrf.mxu0
  %v516 = vadd.f32 %v86, %v515
  %517 = vmatmul.bf16.gmra.mxu0 %v352
  %v518 = vpop.f32.mrf.mxu0
  %v519 = vadd.f32 %v86, %v518
  %v520 = vpop.f32.mrf.mxu0
  %v521 = vadd.f32 %v86, %v520
  %522 = vmatmul.bf16.gmra.mxu0 %v355
  %v523 = vpop.f32.mrf.mxu0
  %v524 = vadd.f32 %v86, %v523
  %v525 = vpop.f32.mrf.mxu0
  %v526 = vadd.f32 %v86, %v525
  %527 = vmatmul.bf16.gmra.mxu0 %v358
  %v528 = vpop.f32.mrf.mxu0
  %v529 = vadd.f32 %v86, %v528
  %v530 = vpop.f32.mrf.mxu0
  %v531 = vadd.f32 %v86, %v530
  %532 = vdwg.mxu0
  %v533 = vmax.f32 %v374, 0.0
  %v534 = vmax.f32 %v376, 0.0
  %v535 = vmax.f32 %v379, 0.0
  %v536 = vmax.f32 %v381, 0.0
  %v537 = vmax.f32 %v384, 0.0
  %v538 = vmax.f32 %v386, 0.0
  %v539 = vmax.f32 %v389, 0.0
  %v540 = vmax.f32 %v391, 0.0
  %v541 = vmax.f32 %v394, 0.0
  %v542 = vmax.f32 %v396, 0.0
  %v543 = vmax.f32 %v399, 0.0
  %v544 = vmax.f32 %v401, 0.0
  %v545 = vmax.f32 %v404, 0.0
  %v546 = vmax.f32 %v406, 0.0
  %v547 = vmax.f32 %v409, 0.0
  %v548 = vmax.f32 %v411, 0.0
  %v549 = vmax.f32 %v414, 0.0
  %v550 = vmax.f32 %v416, 0.0
  %v551 = vmax.f32 %v419, 0.0
  %v552 = vmax.f32 %v421, 0.0
  %v553 = vmax.f32 %v424, 0.0
  %v554 = vmax.f32 %v426, 0.0
  %v555 = vmax.f32 %v429, 0.0
  %v556 = vmax.f32 %v431, 0.0
  %v557 = vmax.f32 %v434, 0.0
  %v558 = vmax.f32 %v436, 0.0
  %v559 = vmax.f32 %v439, 0.0
  %v560 = vmax.f32 %v441, 0.0
  %v561 = vmax.f32 %v444, 0.0
  %v562 = vmax.f32 %v446, 0.0
  %v563 = vmax.f32 %v449, 0.0
  %v564 = vmax.f32 %v451, 0.0
  %v565 = vmax.f32 %v454, 0.0
  %v566 = vmax.f32 %v456, 0.0
  %v567 = vmax.f32 %v459, 0.0
  %v568 = vmax.f32 %v461, 0.0
  %v569 = vmax.f32 %v464, 0.0
  %v570 = vmax.f32 %v466, 0.0
  %v571 = vmax.f32 %v469, 0.0
  %v572 = vmax.f32 %v471, 0.0
  %v573 = vmax.f32 %v474, 0.0
  %v574 = vmax.f32 %v476, 0.0
  %v575 = vmax.f32 %v479, 0.0
  %v576 = vmax.f32 %v481, 0.0
  %v577 = vmax.f32 %v484, 0.0
  %v578 = vmax.f32 %v486, 0.0
  %v579 = vmax.f32 %v489, 0.0
  %v580 = vmax.f32 %v491, 0.0
  %v581 = vmax.f32 %v494, 0.0
  %v582 = vmax.f32 %v496, 0.0
  %v583 = vmax.f32 %v499, 0.0
  %v584 = vmax.f32 %v501, 0.0
  %v585 = vmax.f32 %v504, 0.0
  %v586 = vmax.f32 %v506, 0.0
  %v587 = vmax.f32 %v509, 0.0
  %v588 = vmax.f32 %v511, 0.0
  %v589 = vmax.f32 %v514, 0.0
  %v590 = vmax.f32 %v516, 0.0
  %v591 = vmax.f32 %v519, 0.0
  %v592 = vmax.f32 %v521, 0.0
  %v593 = vmax.f32 %v524, 0.0
  %v594 = vmax.f32 %v526, 0.0
  %v595 = vmax.f32 %v529, 0.0
  %v596 = vmax.f32 %v531, 0.0
  %v597 = vpack.c.bf16 %v533, %v533
  %v598 = vpack.c.bf16 %v534, %v534
  %v599 = vpack.c.bf16 %v535, %v535
  %v600 = vpack.c.bf16 %v536, %v536
  %v601 = vpack.c.bf16 %v537, %v537
  %v602 = vpack.c.bf16 %v538, %v538
  %v603 = vpack.c.bf16 %v539, %v539
  %v604 = vpack.c.bf16 %v540, %v540
  %v605 = vpack.c.bf16 %v541, %v541
  %v606 = vpack.c.bf16 %v542, %v542
  %v607 = vpack.c.bf16 %v543, %v543
  %v608 = vpack.c.bf16 %v544, %v544
  %v609 = vpack.c.bf16 %v545, %v545
  %v610 = vpack.c.bf16 %v546, %v546
  %v611 = vpack.c.bf16 %v547, %v547
  %v612 = vpack.c.bf16 %v548, %v548
  %v613 = vpack.c.bf16 %v549, %v549
  %v614 = vpack.c.bf16 %v550, %v550
  %v615 = vpack.c.bf16 %v551, %v551
  %v616 = vpack.c.bf16 %v552, %v552
  %v617 = vpack.c.bf16 %v553, %v553
  %v618 = vpack.c.bf16 %v554, %v554
  %v619 = vpack.c.bf16 %v555, %v555
  %v620 = vpack.c.bf16 %v556, %v556
  %v621 = vpack.c.bf16 %v557, %v557
  %v622 = vpack.c.bf16 %v558, %v558
  %v623 = vpack.c.bf16 %v559, %v559
  %v624 = vpack.c.bf16 %v560, %v560
  %v625 = vpack.c.bf16 %v561, %v561
  %v626 = vpack.c.bf16 %v562, %v562
  %v627 = vpack.c.bf16 %v563, %v563
  %v628 = vpack.c.bf16 %v564, %v564
  %v629 = vpack.c.bf16 %v565, %v565
  %v630 = vpack.c.bf16 %v566, %v566
  %v631 = vpack.c.bf16 %v567, %v567
  %v632 = vpack.c.bf16 %v568, %v568
  %v633 = vpack.c.bf16 %v569, %v569
  %v634 = vpack.c.bf16 %v570, %v570
  %v635 = vpack.c.bf16 %v571, %v571
  %v636 = vpack.c.bf16 %v572, %v572
  %v637 = vpack.c.bf16 %v573, %v573
  %v638 = vpack.c.bf16 %v574, %v574
  %v639 = vpack.c.bf16 %v575, %v575
  %v640 = vpack.c.bf16 %v576, %v576
  %v641 = vpack.c.bf16 %v577, %v577
  %v642 = vpack.c.bf16 %v578, %v578
  %v643 = vpack.c.bf16 %v579, %v579
  %v644 = vpack.c.bf16 %v580, %v580
  %v645 = vpack.c.bf16 %v581, %v581
  %v646 = vpack.c.bf16 %v582, %v582
  %v647 = vpack.c.bf16 %v583, %v583
  %v648 = vpack.c.bf16 %v584, %v584
  %v649 = vpack.c.bf16 %v585, %v585
  %v650 = vpack.c.bf16 %v586, %v586
  %v651 = vpack.c.bf16 %v587, %v587
  %v652 = vpack.c.bf16 %v588, %v588
  %v653 = vpack.c.bf16 %v589, %v589
  %v654 = vpack.c.bf16 %v590, %v590
  %v655 = vpack.c.bf16 %v591, %v591
  %v656 = vpack.c.bf16 %v592, %v592
  %v657 = vpack.c.bf16 %v593, %v593
  %v658 = vpack.c.bf16 %v594, %v594
  %v659 = vpack.c.bf16 %v595, %v595
  %v660 = vpack.c.bf16 %v596, %v596
  %661 = vst [vmem:[%s3] sm:$0xf] %v597
  %662 = vst [vmem:[%s3 + $0x4] sm:$0xf] %v598
  %663 = vst [vmem:[%s3 + $0x8] sm:$0xf] %v599
  %664 = vst [vmem:[%s3 + $0xc] sm:$0xf] %v600
  %665 = vst [vmem:[%s3 + $0x10] sm:$0xf] %v601
  %666 = vst [vmem:[%s3 + $0x14] sm:$0xf] %v602
  %667 = vst [vmem:[%s3 + $0x18] sm:$0xf] %v603
  %668 = vst [vmem:[%s3 + $0x1c] sm:$0xf] %v604
  %669 = vst [vmem:[%s3 + $0x20] sm:$0xf] %v605
  %670 = vst [vmem:[%s3 + $0x24] sm:$0xf] %v606
  %671 = vst [vmem:[%s3 + $0x28] sm:$0xf] %v607
  %672 = vst [vmem:[%s3 + $0x2c] sm:$0xf] %v608
  %673 = vst [vmem:[%s3 + $0x30] sm:$0xf] %v609
  %674 = vst [vmem:[%s3 + $0x34] sm:$0xf] %v610
  %675 = vst [vmem:[%s3 + $0x38] sm:$0xf] %v611
  %676 = vst [vmem:[%s3 + $0x3c] sm:$0xf] %v612
  %677 = vst [vmem:[%s3 + $0x40] sm:$0xf] %v613
  %678 = vst [vmem:[%s3 + $0x44] sm:$0xf] %v614
  %679 = vst [vmem:[%s3 + $0x48] sm:$0xf] %v615
  %680 = vst [vmem:[%s3 + $0x4c] sm:$0xf] %v616
  %681 = vst [vmem:[%s3 + $0x50] sm:$0xf] %v617
  %682 = vst [vmem:[%s3 + $0x54] sm:$0xf] %v618
  %683 = vst [vmem:[%s3 + $0x58] sm:$0xf] %v619
  %684 = vst [vmem:[%s3 + $0x5c] sm:$0xf] %v620
  %685 = vst [vmem:[%s3 + $0x60] sm:$0xf] %v621
  %686 = vst [vmem:[%s3 + $0x64] sm:$0xf] %v622
  %687 = vst [vmem:[%s3 + $0x68] sm:$0xf] %v623
  %688 = vst [vmem:[%s3 + $0x6c] sm:$0xf] %v624
  %689 = vst [vmem:[%s3 + $0x70] sm:$0xf] %v625
  %690 = vst [vmem:[%s3 + $0x74] sm:$0xf] %v626
  %691 = vst [vmem:[%s3 + $0x78] sm:$0xf] %v627
  %692 = vst [vmem:[%s3 + $0x7c] sm:$0xf] %v628
  %693 = vst [vmem:[%s3 + $0x80] sm:$0xf] %v629
  %694 = vst [vmem:[%s3 + $0x84] sm:$0xf] %v630
  %695 = vst [vmem:[%s3 + $0x88] sm:$0xf] %v631
  %696 = vst [vmem:[%s3 + $0x8c] sm:$0xf] %v632
  %697 = vst [vmem:[%s3 + $0x90] sm:$0xf] %v633
  %698 = vst [vmem:[%s3 + $0x94] sm:$0xf] %v634
  %699 = vst [vmem:[%s3 + $0x98] sm:$0xf] %v635
  %700 = vst [vmem:[%s3 + $0x9c] sm:$0xf] %v636
  %701 = vst [vmem:[%s3 + $0xa0] sm:$0xf] %v637
  %702 = vst [vmem:[%s3 + $0xa4] sm:$0xf] %v638
  %703 = vst [vmem:[%s3 + $0xa8] sm:$0xf] %v639
  %704 = vst [vmem:[%s3 + $0xac] sm:$0xf] %v640
  %705 = vst [vmem:[%s3 + $0xb0] sm:$0xf] %v641
  %706 = vst [vmem:[%s3 + $0xb4] sm:$0xf] %v642
  %707 = vst [vmem:[%s3 + $0xb8] sm:$0xf] %v643
  %708 = vst [vmem:[%s3 + $0xbc] sm:$0xf] %v644
  %709 = vst [vmem:[%s3 + $0xc0] sm:$0xf] %v645
  %710 = vst [vmem:[%s3 + $0xc4] sm:$0xf] %v646
  %711 = vst [vmem:[%s3 + $0xc8] sm:$0xf] %v647
  %712 = vst [vmem:[%s3 + $0xcc] sm:$0xf] %v648
  %713 = vst [vmem:[%s3 + $0xd0] sm:$0xf] %v649
  %714 = vst [vmem:[%s3 + $0xd4] sm:$0xf] %v650
  %715 = vst [vmem:[%s3 + $0xd8] sm:$0xf] %v651
  %716 = vst [vmem:[%s3 + $0xdc] sm:$0xf] %v652
  %717 = vst [vmem:[%s3 + $0xe0] sm:$0xf] %v653
  %718 = vst [vmem:[%s3 + $0xe4] sm:$0xf] %v654
  %719 = vst [vmem:[%s3 + $0xe8] sm:$0xf] %v655
  %720 = vst [vmem:[%s3 + $0xec] sm:$0xf] %v656
  %721 = vst [vmem:[%s3 + $0xf0] sm:$0xf] %v657
  %722 = vst [vmem:[%s3 + $0xf4] sm:$0xf] %v658
  %723 = vst [vmem:[%s3 + $0xf8] sm:$0xf] %v659
  %724 = vst [vmem:[%s3 + $0xfc] sm:$0xf] %v660
  // Predicated region
  $region14: #{_parallel_conv2d_impl.1} parent=0 // pred_check
    _
  $region15: #{_parallel_conv2d_impl.1} parent=0 // pred_check_branch
    %726 = sbr.rel (0) target = $region17
  $region16: #{_parallel_conv2d_impl.1} parent=0 // pred_region
    _
  $region17: #{_parallel_conv2d_impl.1} parent=0 // pred_fallthru
    _
  // Predicated region
  $region18: #{_parallel_conv2d_impl.1} parent=0 // pred_check
    _
  $region19: #{_parallel_conv2d_impl.1} parent=0 // pred_check_branch
    %728 = sbr.rel (0) target = $region21
  $region20: #{_parallel_conv2d_impl.1} parent=0 // pred_region
    _
  $region21: #{_parallel_conv2d_impl.1} parent=0 // pred_fallthru
    _

// kernel: _parallel_conv2d_impl.1
$region0: #{_parallel_conv2d_impl.1}
  #allocation0 [shape = 'u32[]', space=smem, size = 0x4, offset = 0x4, fixed_abs, tag = 'smem constant byte address 0x4 - core index']
  #allocation1 [shape = 'u32[72,128]{1,0:T(1,128)}', space=vmem, size = 0x9000, scoped, tag = 'internal scratch']
  %s0 = inlined_call_operand.vmem [shape: bf16[512,36], index: 0, kind: input, shape index: {}]
  %s1 = inlined_call_operand.vmem [shape: bf16[36,128], index: 1, kind: input, shape index: {}]
  %s2 = inlined_call_operand.vmem [shape: f32[1,128], index: 2, kind: input, shape index: {}]
  %s3 = inlined_call_operand.vmem [shape: bf16[512,128], index: 3, kind: output, shape index: {}]
  %s4 = sld [smem:[#allocation0]]
  $region22: #{_parallel_conv2d_impl.1} parent=0
    _
  %s6 = ssub.s32 1, %s4
  %s7 = scalar_select 0, %s6, %s4
  // Predicated region
  $region2: #{_parallel_conv2d_impl.1} parent=0 // pred_check
    _
  $region3: #{_parallel_conv2d_impl.1} parent=0 // pred_check_branch
    %9 = sbr.rel (0) target = $region5
  $region4: #{_parallel_conv2d_impl.1} parent=0 // pred_region
    _
  $region5: #{_parallel_conv2d_impl.1} parent=0 // pred_fallthru
    _
  // Predicated region
  $region6: #{_parallel_conv2d_impl.1} parent=0 // pred_check
    _
  $region7: #{_parallel_conv2d_impl.1} parent=0 // pred_check_branch
    %11 = sbr.rel (0) target = $region9
  $region8: #{_parallel_conv2d_impl.1} parent=0 // pred_region
    _
  $region9: #{_parallel_conv2d_impl.1} parent=0 // pred_fallthru
    _
  // Predicated region
  $region10: #{_parallel_conv2d_impl.1} parent=0 // pred_check
    _
  $region11: #{_parallel_conv2d_impl.1} parent=0 // pred_check_branch
    %13 = sbr.rel (0) target = $region13
  $region12: #{_parallel_conv2d_impl.1} parent=0 // pred_region
    _
  $region13: #{_parallel_conv2d_impl.1} parent=0 // pred_fallthru
    _
  %v15 = vld [vmem:[%s0] sm:$0xf]
  %v16 = vld [vmem:[%s0 + $0x4] sm:$0xf]
  %v17 = vld [vmem:[%s0 + $0x8] sm:$0xf]
  %v18 = vld [vmem:[%s0 + $0xc] sm:$0xf]
  %v19 = vld [vmem:[%s0 + $0x10] sm:$0xf]
  %v20 = vld [vmem:[%s0 + $0x14] sm:$0xf]
  %v21 = vld [vmem:[%s0 + $0x18] sm:$0xf]
  %v22 = vld [vmem:[%s0 + $0x1c] sm:$0xf]
  %v23 = vld [vmem:[%s0 + $0x20] sm:$0xf]
  %v24 = vld [vmem:[%s0 + $0x24] sm:$0xf]
  %v25 = vld [vmem:[%s0 + $0x28] sm:$0xf]
  %v26 = vld [vmem:[%s0 + $0x2c] sm:$0xf]
  %v27 = vld [vmem:[%s0 + $0x30] sm:$0xf]
  %v28 = vld [vmem:[%s0 + $0x34] sm:$0xf]
  %v29 = vld [vmem:[%s0 + $0x38] sm:$0xf]
  %v30 = vld [vmem:[%s0 + $0x3c] sm:$0xf]
  %v31 = vld [vmem:[%s0 + $0x40] sm:$0xf]
  %v32 = vld [vmem:[%s0 + $0x44] sm:$0xf]
  %v33 = vld [vmem:[%s0 + $0x48] sm:$0xf]
  %v34 = vld [vmem:[%s0 + $0x4c] sm:$0xf]
  %v35 = vld [vmem:[%s0 + $0x50] sm:$0xf]
  %v36 = vld [vmem:[%s0 + $0x54] sm:$0xf]
  %v37 = vld [vmem:[%s0 + $0x58] sm:$0xf]
  %v38 = vld [vmem:[%s0 + $0x5c] sm:$0xf]
  %v39 = vld [vmem:[%s0 + $0x60] sm:$0xf]
  %v40 = vld [vmem:[%s0 + $0x64] sm:$0xf]
  %v41 = vld [vmem:[%s0 + $0x68] sm:$0xf]
  %v42 = vld [vmem:[%s0 + $0x6c] sm:$0xf]
  %v43 = vld [vmem:[%s0 + $0x70] sm:$0xf]
  %v44 = vld [vmem:[%s0 + $0x74] sm:$0xf]
  %v45 = vld [vmem:[%s0 + $0x78] sm:$0xf]
  %v46 = vld [vmem:[%s0 + $0x7c] sm:$0xf]
  %v47 = vld [vmem:[%s0 + $0x80] sm:$0xf]
  %v48 = vld [vmem:[%s0 + $0x84] sm:$0xf]
  %v49 = vld [vmem:[%s0 + $0x88] sm:$0xf]
  %v50 = vld [vmem:[%s0 + $0x8c] sm:$0xf]
  %v51 = vld [vmem:[%s0 + $0x90] sm:$0xf]
  %v52 = vld [vmem:[%s0 + $0x94] sm:$0xf]
  %v53 = vld [vmem:[%s0 + $0x98] sm:$0xf]
  %v54 = vld [vmem:[%s0 + $0x9c] sm:$0xf]
  %v55 = vld [vmem:[%s0 + $0xa0] sm:$0xf]
  %v56 = vld [vmem:[%s0 + $0xa4] sm:$0xf]
  %v57 = vld [vmem:[%s0 + $0xa8] sm:$0xf]
  %v58 = vld [vmem:[%s0 + $0xac] sm:$0xf]
  %v59 = vld [vmem:[%s0 + $0xb0] sm:$0xf]
  %v60 = vld [vmem:[%s0 + $0xb4] sm:$0xf]
  %v61 = vld [vmem:[%s0 + $0xb8] sm:$0xf]
  %v62 = vld [vmem:[%s0 + $0xbc] sm:$0xf]
  %v63 = vld [vmem:[%s0 + $0xc0] sm:$0xf]
  %v64 = vld [vmem:[%s0 + $0xc4] sm:$0xf]
  %v65 = vld [vmem:[%s0 + $0xc8] sm:$0xf]
  %v66 = vld [vmem:[%s0 + $0xcc] sm:$0xf]
  %v67 = vld [vmem:[%s0 + $0xd0] sm:$0xf]
  %v68 = vld [vmem:[%s0 + $0xd4] sm:$0xf]
  %v69 = vld [vmem:[%s0 + $0xd8] sm:$0xf]
  %v70 = vld [vmem:[%s0 + $0xdc] sm:$0xf]
  %v71 = vld [vmem:[%s0 + $0xe0] sm:$0xf]
  %v72 = vld [vmem:[%s0 + $0xe4] sm:$0xf]
  %v73 = vld [vmem:[%s0 + $0xe8] sm:$0xf]
  %v74 = vld [vmem:[%s0 + $0xec] sm:$0xf]
  %v75 = vld [vmem:[%s0 + $0xf0] sm:$0xf]
  %v76 = vld [vmem:[%s0 + $0xf4] sm:$0xf]
  %v77 = vld [vmem:[%s0 + $0xf8] sm:$0xf]
  %v78 = vld [vmem:[%s0 + $0xfc] sm:$0xf]
  %v79 = vld [vmem:[%s1] sm:$0xf]
  %v80 = vld [vmem:[%s1 + $0x4] sm:$0xf]
  %v81 = vld [vmem:[%s1 + $0x8] sm:$0xf]
  %v82 = vld [vmem:[%s1 + $0xc] sm:$0xf]
  %v83 = vld [vmem:[%s1 + $0x10] sm:$0x3]
  %v84 = vld [vmem:[%s2] sm:$0x1]
  %v86 = vperm.slane %v84, 0
  %v152 = vunpack.c.l.b16 %v15
  %v153 = vunpack.c.l.b16 %v16
  %v154 = vunpack.c.l.b16 %v17
  %v155 = vunpack.c.l.b16 %v18
  %v156 = vunpack.c.l.b16 %v19
  %v157 = vunpack.c.l.b16 %v20
  %v158 = vunpack.c.l.b16 %v21
  %v159 = vunpack.c.l.b16 %v22
  %v160 = vunpack.c.l.b16 %v23
  %v161 = vunpack.c.l.b16 %v24
  %v162 = vunpack.c.l.b16 %v25
  %v163 = vunpack.c.l.b16 %v26
  %v164 = vunpack.c.l.b16 %v27
  %v165 = vunpack.c.l.b16 %v28
  %v166 = vunpack.c.l.b16 %v29
  %v167 = vunpack.c.l.b16 %v30
  %v168 = vunpack.c.l.b16 %v31
  %v169 = vunpack.c.l.b16 %v32
  %v170 = vunpack.c.l.b16 %v33
  %v171 = vunpack.c.l.b16 %v34
  %v172 = vunpack.c.l.b16 %v35
  %v173 = vunpack.c.l.b16 %v36
  %v174 = vunpack.c.l.b16 %v37
  %v175 = vunpack.c.l.b16 %v38
  %v176 = vunpack.c.l.b16 %v39
  %v177 = vunpack.c.l.b16 %v40
  %v178 = vunpack.c.l.b16 %v41
  %v179 = vunpack.c.l.b16 %v42
  %v180 = vunpack.c.l.b16 %v43
  %v181 = vunpack.c.l.b16 %v44
  %v182 = vunpack.c.l.b16 %v45
  %v183 = vunpack.c.l.b16 %v46
  %v184 = vunpack.c.l.b16 %v47
  %v185 = vunpack.c.l.b16 %v48
  %v186 = vunpack.c.l.b16 %v49
  %v187 = vunpack.c.l.b16 %v50
  %v188 = vunpack.c.l.b16 %v51
  %v189 = vunpack.c.l.b16 %v52
  %v190 = vunpack.c.l.b16 %v53
  %v191 = vunpack.c.l.b16 %v54
  %v192 = vunpack.c.l.b16 %v55
  %v193 = vunpack.c.l.b16 %v56
  %v194 = vunpack.c.l.b16 %v57
  %v195 = vunpack.c.l.b16 %v58
  %v196 = vunpack.c.l.b16 %v59
  %v197 = vunpack.c.l.b16 %v60
  %v198 = vunpack.c.l.b16 %v61
  %v199 = vunpack.c.l.b16 %v62
  %v200 = vunpack.c.l.b16 %v63
  %v201 = vunpack.c.l.b16 %v64
  %v202 = vunpack.c.l.b16 %v65
  %v203 = vunpack.c.l.b16 %v66
  %v204 = vunpack.c.l.b16 %v67
  %v205 = vunpack.c.l.b16 %v68
  %v206 = vunpack.c.l.b16 %v69
  %v207 = vunpack.c.l.b16 %v70
  %v208 = vunpack.c.l.b16 %v71
  %v209 = vunpack.c.l.b16 %v72
  %v210 = vunpack.c.l.b16 %v73
  %v211 = vunpack.c.l.b16 %v74
  %v212 = vunpack.c.l.b16 %v75
  %v213 = vunpack.c.l.b16 %v76
  %v214 = vunpack.c.l.b16 %v77
  %v215 = vunpack.c.l.b16 %v78
  %v216 = vpack.c.b16 %v153, %v152
  %v217 = vpack.c.b16 %v155, %v154
  %v218 = vpack.c.b16 %v157, %v156
  %v219 = vpack.c.b16 %v159, %v158
  %v220 = vpack.c.b16 %v161, %v160
  %v221 = vpack.c.b16 %v163, %v162
  %v222 = vpack.c.b16 %v165, %v164
  %v223 = vpack.c.b16 %v167, %v166
  %v224 = vpack.c.b16 %v169, %v168
  %v225 = vpack.c.b16 %v171, %v170
  %v226 = vpack.c.b16 %v173, %v172
  %v227 = vpack.c.b16 %v175, %v174
  %v228 = vpack.c.b16 %v177, %v176
  %v229 = vpack.c.b16 %v179, %v178
  %v230 = vpack.c.b16 %v181, %v180
  %v231 = vpack.c.b16 %v183, %v182
  %v232 = vpack.c.b16 %v185, %v184
  %v233 = vpack.c.b16 %v187, %v186
  %v234 = vpack.c.b16 %v189, %v188
  %v235 = vpack.c.b16 %v191, %v190
  %v236 = vpack.c.b16 %v193, %v192
  %v237 = vpack.c.b16 %v195, %v194
  %v238 = vpack.c.b16 %v197, %v196
  %v239 = vpack.c.b16 %v199, %v198
  %v240 = vpack.c.b16 %v201, %v200
  %v241 = vpack.c.b16 %v203, %v202
  %v242 = vpack.c.b16 %v205, %v204
  %v243 = vpack.c.b16 %v207, %v206
  %v244 = vpack.c.b16 %v209, %v208
  %v245 = vpack.c.b16 %v211, %v210
  %v246 = vpack.c.b16 %v213, %v212
  %v247 = vpack.c.b16 %v215, %v214
  %v253 = vunpack.c.l.b16 %v79
  %v254 = vunpack.c.l.b16 %v80
  %v255 = vunpack.c.l.b16 %v81
  %v256 = vunpack.c.l.b16 %v82
  %v257 = vunpack.c.l.b16 %v83
  %v258 = vpack.c.b16 %v254, %v253
  %v259 = vpack.c.b16 %v256, %v255
  %v260 = vpack.c.b16 %v257, %v257
  %vm263 = vcmask 293888
  %v265 = vsel %vm263, %v216, 0
  %v268 = vsel %vm263, %v217, 0
  %v271 = vsel %vm263, %v218, 0
  %v274 = vsel %vm263, %v219, 0
  %v277 = vsel %vm263, %v220, 0
  %v280 = vsel %vm263, %v221, 0
  %v283 = vsel %vm263, %v222, 0
  %v286 = vsel %vm263, %v223, 0
  %v289 = vsel %vm263, %v224, 0
  %v292 = vsel %vm263, %v225, 0
  %v295 = vsel %vm263, %v226, 0
  %v298 = vsel %vm263, %v227, 0
  %v301 = vsel %vm263, %v228, 0
  %v304 = vsel %vm263, %v229, 0
  %v307 = vsel %vm263, %v230, 0
  %v310 = vsel %vm263, %v231, 0
  %v313 = vsel %vm263, %v232, 0
  %v316 = vsel %vm263, %v233, 0
  %v319 = vsel %vm263, %v234, 0
  %v322 = vsel %vm263, %v235, 0
  %v325 = vsel %vm263, %v236, 0
  %v328 = vsel %vm263, %v237, 0
  %v331 = vsel %vm263, %v238, 0
  %v334 = vsel %vm263, %v239, 0
  %v337 = vsel %vm263, %v240, 0
  %v340 = vsel %vm263, %v241, 0
  %v343 = vsel %vm263, %v242, 0
  %v346 = vsel %vm263, %v243, 0
  %v349 = vsel %vm263, %v244, 0
  %v352 = vsel %vm263, %v245, 0
  %v355 = vsel %vm263, %v246, 0
  %v358 = vsel %vm263, %v247, 0
  %vm360 = vcmask 1041408
  %v362 = vsel %vm360, %v260, 0
  %364 = vmatpush.bf16.msra.mxu0 0
  %365 = vmatpush.bf16.msra.mxu0 0
  %366 = vmatpush.bf16.msra.mxu0 0
  %367 = vmatpush.bf16.msra.mxu0 0
  %368 = vmatpush.bf16.msra.mxu0 0
  %369 = vmatpush.bf16.msra.mxu0 %v362
  %370 = vmatpush.bf16.msra.mxu0 %v259
  %371 = vmatpush.bf16.msra.mxu0 %v258
  %372 = vmatmul.bf16.gmra.mxu0 %v265
  %v373 = vpop.f32.mrf.mxu0
  %v374 = vadd.f32 %v86, %v373
  %v375 = vpop.f32.mrf.mxu0
  %v376 = vadd.f32 %v86, %v375
  %377 = vmatmul.bf16.gmra.mxu0 %v268
  %v378 = vpop.f32.mrf.mxu0
  %v379 = vadd.f32 %v86, %v378
  %v380 = vpop.f32.mrf.mxu0
  %v381 = vadd.f32 %v86, %v380
  %382 = vmatmul.bf16.gmra.mxu0 %v271
  %v383 = vpop.f32.mrf.mxu0
  %v384 = vadd.f32 %v86, %v383
  %v385 = vpop.f32.mrf.mxu0
  %v386 = vadd.f32 %v86, %v385
  %387 = vmatmul.bf16.gmra.mxu0 %v274
  %v388 = vpop.f32.mrf.mxu0
  %v389 = vadd.f32 %v86, %v388
  %v390 = vpop.f32.mrf.mxu0
  %v391 = vadd.f32 %v86, %v390
  %392 = vmatmul.bf16.gmra.mxu0 %v277
  %v393 = vpop.f32.mrf.mxu0
  %v394 = vadd.f32 %v86, %v393
  %v395 = vpop.f32.mrf.mxu0
  %v396 = vadd.f32 %v86, %v395
  %397 = vmatmul.bf16.gmra.mxu0 %v280
  %v398 = vpop.f32.mrf.mxu0
  %v399 = vadd.f32 %v86, %v398
  %v400 = vpop.f32.mrf.mxu0
  %v401 = vadd.f32 %v86, %v400
  %402 = vmatmul.bf16.gmra.mxu0 %v283
  %v403 = vpop.f32.mrf.mxu0
  %v404 = vadd.f32 %v86, %v403
  %v405 = vpop.f32.mrf.mxu0
  %v406 = vadd.f32 %v86, %v405
  %407 = vmatmul.bf16.gmra.mxu0 %v286
  %v408 = vpop.f32.mrf.mxu0
  %v409 = vadd.f32 %v86, %v408
  %v410 = vpop.f32.mrf.mxu0
  %v411 = vadd.f32 %v86, %v410
  %412 = vmatmul.bf16.gmra.mxu0 %v289
  %v413 = vpop.f32.mrf.mxu0
  %v414 = vadd.f32 %v86, %v413
  %v415 = vpop.f32.mrf.mxu0
  %v416 = vadd.f32 %v86, %v415
  %417 = vmatmul.bf16.gmra.mxu0 %v292
  %v418 = vpop.f32.mrf.mxu0
  %v419 = vadd.f32 %v86, %v418
  %v420 = vpop.f32.mrf.mxu0
  %v421 = vadd.f32 %v86, %v420
  %422 = vmatmul.bf16.gmra.mxu0 %v295
  %v423 = vpop.f32.mrf.mxu0
  %v424 = vadd.f32 %v86, %v423
  %v425 = vpop.f32.mrf.mxu0
  %v426 = vadd.f32 %v86, %v425
  %427 = vmatmul.bf16.gmra.mxu0 %v298
  %v428 = vpop.f32.mrf.mxu0
  %v429 = vadd.f32 %v86, %v428
  %v430 = vpop.f32.mrf.mxu0
  %v431 = vadd.f32 %v86, %v430
  %432 = vmatmul.bf16.gmra.mxu0 %v301
  %v433 = vpop.f32.mrf.mxu0
  %v434 = vadd.f32 %v86, %v433
  %v435 = vpop.f32.mrf.mxu0
  %v436 = vadd.f32 %v86, %v435
  %437 = vmatmul.bf16.gmra.mxu0 %v304
  %v438 = vpop.f32.mrf.mxu0
  %v439 = vadd.f32 %v86, %v438
  %v440 = vpop.f32.mrf.mxu0
  %v441 = vadd.f32 %v86, %v440
  %442 = vmatmul.bf16.gmra.mxu0 %v307
  %v443 = vpop.f32.mrf.mxu0
  %v444 = vadd.f32 %v86, %v443
  %v445 = vpop.f32.mrf.mxu0
  %v446 = vadd.f32 %v86, %v445
  %447 = vmatmul.bf16.gmra.mxu0 %v310
  %v448 = vpop.f32.mrf.mxu0
  %v449 = vadd.f32 %v86, %v448
  %v450 = vpop.f32.mrf.mxu0
  %v451 = vadd.f32 %v86, %v450
  %452 = vmatmul.bf16.gmra.mxu0 %v313
  %v453 = vpop.f32.mrf.mxu0
  %v454 = vadd.f32 %v86, %v453
  %v455 = vpop.f32.mrf.mxu0
  %v456 = vadd.f32 %v86, %v455
  %457 = vmatmul.bf16.gmra.mxu0 %v316
  %v458 = vpop.f32.mrf.mxu0
  %v459 = vadd.f32 %v86, %v458
  %v460 = vpop.f32.mrf.mxu0
  %v461 = vadd.f32 %v86, %v460
  %462 = vmatmul.bf16.gmra.mxu0 %v319
  %v463 = vpop.f32.mrf.mxu0
  %v464 = vadd.f32 %v86, %v463
  %v465 = vpop.f32.mrf.mxu0
  %v466 = vadd.f32 %v86, %v465
  %467 = vmatmul.bf16.gmra.mxu0 %v322
  %v468 = vpop.f32.mrf.mxu0
  %v469 = vadd.f32 %v86, %v468
  %v470 = vpop.f32.mrf.mxu0
  %v471 = vadd.f32 %v86, %v470
  %472 = vmatmul.bf16.gmra.mxu0 %v325
  %v473 = vpop.f32.mrf.mxu0
  %v474 = vadd.f32 %v86, %v473
  %v475 = vpop.f32.mrf.mxu0
  %v476 = vadd.f32 %v86, %v475
  %477 = vmatmul.bf16.gmra.mxu0 %v328
  %v478 = vpop.f32.mrf.mxu0
  %v479 = vadd.f32 %v86, %v478
  %v480 = vpop.f32.mrf.mxu0
  %v481 = vadd.f32 %v86, %v480
  %482 = vmatmul.bf16.gmra.mxu0 %v331
  %v483 = vpop.f32.mrf.mxu0
  %v484 = vadd.f32 %v86, %v483
  %v485 = vpop.f32.mrf.mxu0
  %v486 = vadd.f32 %v86, %v485
  %487 = vmatmul.bf16.gmra.mxu0 %v334
  %v488 = vpop.f32.mrf.mxu0
  %v489 = vadd.f32 %v86, %v488
  %v490 = vpop.f32.mrf.mxu0
  %v491 = vadd.f32 %v86, %v490
  %492 = vmatmul.bf16.gmra.mxu0 %v337
  %v493 = vpop.f32.mrf.mxu0
  %v494 = vadd.f32 %v86, %v493
  %v495 = vpop.f32.mrf.mxu0
  %v496 = vadd.f32 %v86, %v495
  %497 = vmatmul.bf16.gmra.mxu0 %v340
  %v498 = vpop.f32.mrf.mxu0
  %v499 = vadd.f32 %v86, %v498
  %v500 = vpop.f32.mrf.mxu0
  %v501 = vadd.f32 %v86, %v500
  %502 = vmatmul.bf16.gmra.mxu0 %v343
  %v503 = vpop.f32.mrf.mxu0
  %v504 = vadd.f32 %v86, %v503
  %v505 = vpop.f32.mrf.mxu0
  %v506 = vadd.f32 %v86, %v505
  %507 = vmatmul.bf16.gmra.mxu0 %v346
  %v508 = vpop.f32.mrf.mxu0
  %v509 = vadd.f32 %v86, %v508
  %v510 = vpop.f32.mrf.mxu0
  %v511 = vadd.f32 %v86, %v510
  %512 = vmatmul.bf16.gmra.mxu0 %v349
  %v513 = vpop.f32.mrf.mxu0
  %v514 = vadd.f32 %v86, %v513
  %v515 = vpop.f32.mrf.mxu0
  %v516 = vadd.f32 %v86, %v515
  %517 = vmatmul.bf16.gmra.mxu0 %v352
  %v518 = vpop.f32.mrf.mxu0
  %v519 = vadd.f32 %v86, %v518
  %v520 = vpop.f32.mrf.mxu0
  %v521 = vadd.f32 %v86, %v520
  %522 = vmatmul.bf16.gmra.mxu0 %v355
  %v523 = vpop.f32.mrf.mxu0
  %v524 = vadd.f32 %v86, %v523
  %v525 = vpop.f32.mrf.mxu0
  %v526 = vadd.f32 %v86, %v525
  %527 = vmatmul.bf16.gmra.mxu0 %v358
  %v528 = vpop.f32.mrf.mxu0
  %v529 = vadd.f32 %v86, %v528
  %v530 = vpop.f32.mrf.mxu0
  %v531 = vadd.f32 %v86, %v530
  %532 = vdwg.mxu0
  %v533 = vmax.f32 %v374, 0.0
  %v534 = vmax.f32 %v376, 0.0
  %v535 = vmax.f32 %v379, 0.0
  %v536 = vmax.f32 %v381, 0.0
  %v537 = vmax.f32 %v384, 0.0
  %v538 = vmax.f32 %v386, 0.0
  %v539 = vmax.f32 %v389, 0.0
  %v540 = vmax.f32 %v391, 0.0
  %v541 = vmax.f32 %v394, 0.0
  %v542 = vmax.f32 %v396, 0.0
  %v543 = vmax.f32 %v399, 0.0
  %v544 = vmax.f32 %v401, 0.0
  %v545 = vmax.f32 %v404, 0.0
  %v546 = vmax.f32 %v406, 0.0
  %v547 = vmax.f32 %v409, 0.0
  %v548 = vmax.f32 %v411, 0.0
  %v549 = vmax.f32 %v414, 0.0
  %v550 = vmax.f32 %v416, 0.0
  %v551 = vmax.f32 %v419, 0.0
  %v552 = vmax.f32 %v421, 0.0
  %v553 = vmax.f32 %v424, 0.0
  %v554 = vmax.f32 %v426, 0.0
  %v555 = vmax.f32 %v429, 0.0
  %v556 = vmax.f32 %v431, 0.0
  %v557 = vmax.f32 %v434, 0.0
  %v558 = vmax.f32 %v436, 0.0
  %v559 = vmax.f32 %v439, 0.0
  %v560 = vmax.f32 %v441, 0.0
  %v561 = vmax.f32 %v444, 0.0
  %v562 = vmax.f32 %v446, 0.0
  %v563 = vmax.f32 %v449, 0.0
  %v564 = vmax.f32 %v451, 0.0
  %v565 = vmax.f32 %v454, 0.0
  %v566 = vmax.f32 %v456, 0.0
  %v567 = vmax.f32 %v459, 0.0
  %v568 = vmax.f32 %v461, 0.0
  %v569 = vmax.f32 %v464, 0.0
  %v570 = vmax.f32 %v466, 0.0
  %v571 = vmax.f32 %v469, 0.0
  %v572 = vmax.f32 %v471, 0.0
  %v573 = vmax.f32 %v474, 0.0
  %v574 = vmax.f32 %v476, 0.0
  %v575 = vmax.f32 %v479, 0.0
  %v576 = vmax.f32 %v481, 0.0
  %v577 = vmax.f32 %v484, 0.0
  %v578 = vmax.f32 %v486, 0.0
  %v579 = vmax.f32 %v489, 0.0
  %v580 = vmax.f32 %v491, 0.0
  %v581 = vmax.f32 %v494, 0.0
  %v582 = vmax.f32 %v496, 0.0
  %v583 = vmax.f32 %v499, 0.0
  %v584 = vmax.f32 %v501, 0.0
  %v585 = vmax.f32 %v504, 0.0
  %v586 = vmax.f32 %v506, 0.0
  %v587 = vmax.f32 %v509, 0.0
  %v588 = vmax.f32 %v511, 0.0
  %v589 = vmax.f32 %v514, 0.0
  %v590 = vmax.f32 %v516, 0.0
  %v591 = vmax.f32 %v519, 0.0
  %v592 = vmax.f32 %v521, 0.0
  %v593 = vmax.f32 %v524, 0.0
  %v594 = vmax.f32 %v526, 0.0
  %v595 = vmax.f32 %v529, 0.0
  %v596 = vmax.f32 %v531, 0.0
  %v597 = vpack.c.bf16 %v533, %v533
  %v598 = vpack.c.bf16 %v534, %v534
  %v599 = vpack.c.bf16 %v535, %v535
  %v600 = vpack.c.bf16 %v536, %v536
  %v601 = vpack.c.bf16 %v537, %v537
  %v602 = vpack.c.bf16 %v538, %v538
  %v603 = vpack.c.bf16 %v539, %v539
  %v604 = vpack.c.bf16 %v540, %v540
  %v605 = vpack.c.bf16 %v541, %v541
  %v606 = vpack.c.bf16 %v542, %v542
  %v607 = vpack.c.bf16 %v543, %v543
  %v608 = vpack.c.bf16 %v544, %v544
  %v609 = vpack.c.bf16 %v545, %v545
  %v610 = vpack.c.bf16 %v546, %v546
  %v611 = vpack.c.bf16 %v547, %v547
  %v612 = vpack.c.bf16 %v548, %v548
  %v613 = vpack.c.bf16 %v549, %v549
  %v614 = vpack.c.bf16 %v550, %v550
  %v615 = vpack.c.bf16 %v551, %v551
  %v616 = vpack.c.bf16 %v552, %v552
  %v617 = vpack.c.bf16 %v553, %v553
  %v618 = vpack.c.bf16 %v554, %v554
  %v619 = vpack.c.bf16 %v555, %v555
  %v620 = vpack.c.bf16 %v556, %v556
  %v621 = vpack.c.bf16 %v557, %v557
  %v622 = vpack.c.bf16 %v558, %v558
  %v623 = vpack.c.bf16 %v559, %v559
  %v624 = vpack.c.bf16 %v560, %v560
  %v625 = vpack.c.bf16 %v561, %v561
  %v626 = vpack.c.bf16 %v562, %v562
  %v627 = vpack.c.bf16 %v563, %v563
  %v628 = vpack.c.bf16 %v564, %v564
  %v629 = vpack.c.bf16 %v565, %v565
  %v630 = vpack.c.bf16 %v566, %v566
  %v631 = vpack.c.bf16 %v567, %v567
  %v632 = vpack.c.bf16 %v568, %v568
  %v633 = vpack.c.bf16 %v569, %v569
  %v634 = vpack.c.bf16 %v570, %v570
  %v635 = vpack.c.bf16 %v571, %v571
  %v636 = vpack.c.bf16 %v572, %v572
  %v637 = vpack.c.bf16 %v573, %v573
  %v638 = vpack.c.bf16 %v574, %v574
  %v639 = vpack.c.bf16 %v575, %v575
  %v640 = vpack.c.bf16 %v576, %v576
  %v641 = vpack.c.bf16 %v577, %v577
  %v642 = vpack.c.bf16 %v578, %v578
  %v643 = vpack.c.bf16 %v579, %v579
  %v644 = vpack.c.bf16 %v580, %v580
  %v645 = vpack.c.bf16 %v581, %v581
  %v646 = vpack.c.bf16 %v582, %v582
  %v647 = vpack.c.bf16 %v583, %v583
  %v648 = vpack.c.bf16 %v584, %v584
  %v649 = vpack.c.bf16 %v585, %v585
  %v650 = vpack.c.bf16 %v586, %v586
  %v651 = vpack.c.bf16 %v587, %v587
  %v652 = vpack.c.bf16 %v588, %v588
  %v653 = vpack.c.bf16 %v589, %v589
  %v654 = vpack.c.bf16 %v590, %v590
  %v655 = vpack.c.bf16 %v591, %v591
  %v656 = vpack.c.bf16 %v592, %v592
  %v657 = vpack.c.bf16 %v593, %v593
  %v658 = vpack.c.bf16 %v594, %v594
  %v659 = vpack.c.bf16 %v595, %v595
  %v660 = vpack.c.bf16 %v596, %v596
  %661 = vst [vmem:[%s3] sm:$0xf] %v597
  %662 = vst [vmem:[%s3 + $0x4] sm:$0xf] %v598
  %663 = vst [vmem:[%s3 + $0x8] sm:$0xf] %v599
  %664 = vst [vmem:[%s3 + $0xc] sm:$0xf] %v600
  %665 = vst [vmem:[%s3 + $0x10] sm:$0xf] %v601
  %666 = vst [vmem:[%s3 + $0x14] sm:$0xf] %v602
  %667 = vst [vmem:[%s3 + $0x18] sm:$0xf] %v603
  %668 = vst [vmem:[%s3 + $0x1c] sm:$0xf] %v604
  %669 = vst [vmem:[%s3 + $0x20] sm:$0xf] %v605
  %670 = vst [vmem:[%s3 + $0x24] sm:$0xf] %v606
  %671 = vst [vmem:[%s3 + $0x28] sm:$0xf] %v607
  %672 = vst [vmem:[%s3 + $0x2c] sm:$0xf] %v608
  %673 = vst [vmem:[%s3 + $0x30] sm:$0xf] %v609
  %674 = vst [vmem:[%s3 + $0x34] sm:$0xf] %v610
  %675 = vst [vmem:[%s3 + $0x38] sm:$0xf] %v611
  %676 = vst [vmem:[%s3 + $0x3c] sm:$0xf] %v612
  %677 = vst [vmem:[%s3 + $0x40] sm:$0xf] %v613
  %678 = vst [vmem:[%s3 + $0x44] sm:$0xf] %v614
  %679 = vst [vmem:[%s3 + $0x48] sm:$0xf] %v615
  %680 = vst [vmem:[%s3 + $0x4c] sm:$0xf] %v616
  %681 = vst [vmem:[%s3 + $0x50] sm:$0xf] %v617
  %682 = vst [vmem:[%s3 + $0x54] sm:$0xf] %v618
  %683 = vst [vmem:[%s3 + $0x58] sm:$0xf] %v619
  %684 = vst [vmem:[%s3 + $0x5c] sm:$0xf] %v620
  %685 = vst [vmem:[%s3 + $0x60] sm:$0xf] %v621
  %686 = vst [vmem:[%s3 + $0x64] sm:$0xf] %v622
  %687 = vst [vmem:[%s3 + $0x68] sm:$0xf] %v623
  %688 = vst [vmem:[%s3 + $0x6c] sm:$0xf] %v624
  %689 = vst [vmem:[%s3 + $0x70] sm:$0xf] %v625
  %690 = vst [vmem:[%s3 + $0x74] sm:$0xf] %v626
  %691 = vst [vmem:[%s3 + $0x78] sm:$0xf] %v627
  %692 = vst [vmem:[%s3 + $0x7c] sm:$0xf] %v628
  %693 = vst [vmem:[%s3 + $0x80] sm:$0xf] %v629
  %694 = vst [vmem:[%s3 + $0x84] sm:$0xf] %v630
  %695 = vst [vmem:[%s3 + $0x88] sm:$0xf] %v631
  %696 = vst [vmem:[%s3 + $0x8c] sm:$0xf] %v632
  %697 = vst [vmem:[%s3 + $0x90] sm:$0xf] %v633
  %698 = vst [vmem:[%s3 + $0x94] sm:$0xf] %v634
  %699 = vst [vmem:[%s3 + $0x98] sm:$0xf] %v635
  %700 = vst [vmem:[%s3 + $0x9c] sm:$0xf] %v636
  %701 = vst [vmem:[%s3 + $0xa0] sm:$0xf] %v637
  %702 = vst [vmem:[%s3 + $0xa4] sm:$0xf] %v638
  %703 = vst [vmem:[%s3 + $0xa8] sm:$0xf] %v639
  %704 = vst [vmem:[%s3 + $0xac] sm:$0xf] %v640
  %705 = vst [vmem:[%s3 + $0xb0] sm:$0xf] %v641
  %706 = vst [vmem:[%s3 + $0xb4] sm:$0xf] %v642
  %707 = vst [vmem:[%s3 + $0xb8] sm:$0xf] %v643
  %708 = vst [vmem:[%s3 + $0xbc] sm:$0xf] %v644
  %709 = vst [vmem:[%s3 + $0xc0] sm:$0xf] %v645
  %710 = vst [vmem:[%s3 + $0xc4] sm:$0xf] %v646
  %711 = vst [vmem:[%s3 + $0xc8] sm:$0xf] %v647
  %712 = vst [vmem:[%s3 + $0xcc] sm:$0xf] %v648
  %713 = vst [vmem:[%s3 + $0xd0] sm:$0xf] %v649
  %714 = vst [vmem:[%s3 + $0xd4] sm:$0xf] %v650
  %715 = vst [vmem:[%s3 + $0xd8] sm:$0xf] %v651
  %716 = vst [vmem:[%s3 + $0xdc] sm:$0xf] %v652
  %717 = vst [vmem:[%s3 + $0xe0] sm:$0xf] %v653
  %718 = vst [vmem:[%s3 + $0xe4] sm:$0xf] %v654
  %719 = vst [vmem:[%s3 + $0xe8] sm:$0xf] %v655
  %720 = vst [vmem:[%s3 + $0xec] sm:$0xf] %v656
  %721 = vst [vmem:[%s3 + $0xf0] sm:$0xf] %v657
  %722 = vst [vmem:[%s3 + $0xf4] sm:$0xf] %v658
  %723 = vst [vmem:[%s3 + $0xf8] sm:$0xf] %v659
  %724 = vst [vmem:[%s3 + $0xfc] sm:$0xf] %v660
  // Predicated region
  $region14: #{_parallel_conv2d_impl.1} parent=0 // pred_check
    _
  $region15: #{_parallel_conv2d_impl.1} parent=0 // pred_check_branch
    %726 = sbr.rel (0) target = $region17
  $region16: #{_parallel_conv2d_impl.1} parent=0 // pred_region
    _
  $region17: #{_parallel_conv2d_impl.1} parent=0 // pred_fallthru
    _
  // Predicated region
  $region18: #{_parallel_conv2d_impl.1} parent=0 // pred_check
    _
  $region19: #{_parallel_conv2d_impl.1} parent=0 // pred_check_branch
    %728 = sbr.rel (0) target = $region21
  $region20: #{_parallel_conv2d_impl.1} parent=0 // pred_region
    _
  $region21: #{_parallel_conv2d_impl.1} parent=0 // pred_fallthru
    _

</llo_original>
